<compile_context>
chip_gen: v5e
topology: v5e:2x2
jax: 0.10.0
libtpu: 0.0.40
codegen_flags: <defaults>
</compile_context>

<pallas_src>
import jax
import jax.numpy as jnp
from jax.experimental import pallas as pl
from jax.experimental.pallas import tpu as pltpu


# Params layout inside the flat SMEM vector (17 floats total):
#   [0:8)   w1, row-major [in=2, out=4]  -> w1[0, j] = p[j], w1[1, j] = p[4+j]
#   [8:12)  b1[j]
#   [12:16) w2[j, 0]
#   [16]    b2
def _mlp_kernel(params_ref, x_ref, o_ref):
    # x_ref block: [2, TR, TC] f32 -- feature-major, (8,128)-dense tiles.
    x0 = x_ref[0]              # [TR, TC]
    x1 = x_ref[1]              # [TR, TC]

    z = None
    for j in range(4):         # fully unrolled: 12 MACs + 4 relu on the VPU
        w1_0j = params_ref[j]
        w1_1j = params_ref[4 + j]
        b1_j = params_ref[8 + j]
        w2_j = params_ref[12 + j]
        h_j = jnp.maximum(x0 * w1_0j + x1 * w1_1j + b1_j, 0.0)
        contrib = h_j * w2_j
        z = contrib if z is None else z + contrib
    z = z + params_ref[16]

    # Exact sigmoid via a single EUP transcendental: sigmoid(z) = 0.5*tanh(z/2)+0.5
    o_ref[...] = (0.5 * jnp.tanh(0.5 * z) + 0.5).astype(o_ref.dtype)


def _round_up(a, m):
    return (a + m - 1) // m * m


def logistic_regression_forward(x, w1, b1, w2, b2):
    """x: [B, 2]; w1: [2, 4]; b1: [1, 4]; w2: [4, 1]; b2: [1, 1]. Returns [B, 1] f32."""
    B = x.shape[0]

    # Flatten all 17 parameters into one small SMEM-resident vector.
    params = jnp.concatenate(
        [w1.reshape(-1), b1.reshape(-1), w2.reshape(-1), b2.reshape(-1)]
    ).astype(jnp.float32)

    # Choose a lane-dense 2-D batch layout: B -> [R_pad, C] with C a multiple
    # of 128 (lanes) and the row tile a multiple of 8 (sublanes).
    C = min(512, _round_up(B, 128))            # lane width (multiple of 128)
    R = pl.cdiv(B, C)
    tile_r = min(512, _round_up(R, 8))         # sublane-aligned row tile
    R_pad = _round_up(R, tile_r)
    B_pad = R_pad * C

    xp = x.astype(jnp.float32)
    if B_pad != B:
        xp = jnp.pad(xp, ((0, B_pad - B), (0, 0)))
    # Feature-major (8,128)-dense slab: [2, R_pad, C].
    xt = xp.T.reshape(2, R_pad, C)

    grid = (R_pad // tile_r,)

    y2d = pl.pallas_call(
        _mlp_kernel,
        out_shape=jax.ShapeDtypeStruct((R_pad, C), jnp.float32),
        grid=grid,
        in_specs=[
            # 17 scalars -> SMEM, read as scalars (no padded VMEM vreg tiles).
            pl.BlockSpec(memory_space=pltpu.MemorySpace.SMEM),
            # x block: [2, tile_r, C] = up to 2 MiB, batch-blocked over rows.
            pl.BlockSpec((2, tile_r, C), lambda i: (0, i, 0)),
        ],
        out_specs=pl.BlockSpec((tile_r, C), lambda i: (i, 0)),
        compiler_params=pltpu.CompilerParams(
            dimension_semantics=("parallel",),
            vmem_limit_bytes=32 * 1024 * 1024,
        ),
    )(params, xt)

    # Row-major [R_pad, C] flattens back to sample order; drop the padded tail.
    return y2d.reshape(B_pad)[:B].reshape(B, 1)


def init_params(key):
    """Deterministic init mirroring nn.Linear's default (uniform +-1/sqrt(fan_in))."""
    k1, k2, k3, k4 = jax.random.split(key, 4)
    bound1 = 1.0 / jnp.sqrt(2.0)   # fan_in = 2
    bound2 = 1.0 / jnp.sqrt(4.0)   # fan_in = 4
    # Stored as [in, out] (transposed vs. PyTorch's [out, in]).
    w1 = jax.random.uniform(k1, (2, 4), jnp.float32, -bound1, bound1)
    b1 = jax.random.uniform(k2, (1, 4), jnp.float32, -bound1, bound1)
    w2 = jax.random.uniform(k3, (4, 1), jnp.float32, -bound2, bound2)
    b2 = jax.random.uniform(k4, (1, 1), jnp.float32, -bound2, bound2)
    return w1, b1, w2, b2


def reference_forward(x, w1, b1, w2, b2):
    hp = jax.lax.Precision.HIGHEST
    h = jnp.maximum(jnp.dot(x, w1, precision=hp) + b1, 0.0)
    return jax.nn.sigmoid(jnp.dot(h, w2, precision=hp) + b2)


if __name__ == "__main__":
    key = jax.random.PRNGKey(0)
    kx, kp = jax.random.split(key)
    B = 8
    x = jax.random.normal(kx, (B, 2), jnp.float32)
    w1, b1, w2, b2 = init_params(kp)

    y = logistic_regression_forward(x, w1, b1, w2, b2)
    y = jax.block_until_ready(y)

    y_ref = reference_forward(x, w1, b1, w2, b2)
    assert y.shape == (B, 1)
    assert jnp.allclose(y, y_ref, atol=1e-5, rtol=1e-5), (y, y_ref)

    print("KERNEL_OK")
</pallas_src>

<mosaic_0001>
module attributes {stable_mosaic.version = 11 : i64} {
  func.func @_mlp_kernel(%arg0: i32, %arg1: memref<17xf32, #tpu.memory_space<smem>>, %arg2: memref<2x8x128xf32, #tpu.memory_space<vmem>>, %arg3: memref<8x128xf32, #tpu.memory_space<vmem>>) attributes {dimension_semantics = [#tpu.dimension_semantics<parallel>], iteration_bounds = array<i64: 1>, scalar_prefetch = 0 : i64, scratch_operands = 0 : i64, tpu.core_type = #tpu.core_type<tc>, window_params = [{transform_indices = @transform_0, window_bounds = array<i64: 17>}, {transform_indices = @transform_1, window_bounds = array<i64: 2, 8, 128>}, {transform_indices = @transform_2, window_bounds = array<i64: 8, 128>}]} {
    %c0 = arith.constant 0 : index
    %c0_0 = arith.constant 0 : index
    %c0_1 = arith.constant 0 : index
    %0 = vector.load %arg2[%c0, %c0_0, %c0_1] : memref<2x8x128xf32, #tpu.memory_space<vmem>>, vector<1x8x128xf32>
    %1 = vector.shape_cast %0 : vector<1x8x128xf32> to vector<8x128xf32>
    %c1 = arith.constant 1 : index
    %c0_2 = arith.constant 0 : index
    %c0_3 = arith.constant 0 : index
    %2 = vector.load %arg2[%c1, %c0_2, %c0_3] : memref<2x8x128xf32, #tpu.memory_space<vmem>>, vector<1x8x128xf32>
    %3 = vector.shape_cast %2 : vector<1x8x128xf32> to vector<8x128xf32>
    %c0_4 = arith.constant 0 : index
    %4 = memref.load %arg1[%c0_4] : memref<17xf32, #tpu.memory_space<smem>>
    %c4 = arith.constant 4 : index
    %5 = memref.load %arg1[%c4] : memref<17xf32, #tpu.memory_space<smem>>
    %c8 = arith.constant 8 : index
    %6 = memref.load %arg1[%c8] : memref<17xf32, #tpu.memory_space<smem>>
    %c12 = arith.constant 12 : index
    %7 = memref.load %arg1[%c12] : memref<17xf32, #tpu.memory_space<smem>>
    %8 = vector.broadcast %4 : f32 to vector<8x128xf32>
    %9 = arith.mulf %1, %8 : vector<8x128xf32>
    %10 = vector.broadcast %5 : f32 to vector<8x128xf32>
    %11 = arith.mulf %3, %10 : vector<8x128xf32>
    %12 = arith.addf %9, %11 : vector<8x128xf32>
    %13 = vector.broadcast %6 : f32 to vector<8x128xf32>
    %14 = arith.addf %12, %13 : vector<8x128xf32>
    %cst = arith.constant 0.000000e+00 : f32
    %15 = vector.broadcast %cst : f32 to vector<8x128xf32>
    %16 = arith.maximumf %14, %15 : vector<8x128xf32>
    %17 = vector.broadcast %7 : f32 to vector<8x128xf32>
    %18 = arith.mulf %16, %17 : vector<8x128xf32>
    %c1_5 = arith.constant 1 : index
    %19 = memref.load %arg1[%c1_5] : memref<17xf32, #tpu.memory_space<smem>>
    %c5 = arith.constant 5 : index
    %20 = memref.load %arg1[%c5] : memref<17xf32, #tpu.memory_space<smem>>
    %c9 = arith.constant 9 : index
    %21 = memref.load %arg1[%c9] : memref<17xf32, #tpu.memory_space<smem>>
    %c13 = arith.constant 13 : index
    %22 = memref.load %arg1[%c13] : memref<17xf32, #tpu.memory_space<smem>>
    %23 = vector.broadcast %19 : f32 to vector<8x128xf32>
    %24 = arith.mulf %1, %23 : vector<8x128xf32>
    %25 = vector.broadcast %20 : f32 to vector<8x128xf32>
    %26 = arith.mulf %3, %25 : vector<8x128xf32>
    %27 = arith.addf %24, %26 : vector<8x128xf32>
    %28 = vector.broadcast %21 : f32 to vector<8x128xf32>
    %29 = arith.addf %27, %28 : vector<8x128xf32>
    %cst_6 = arith.constant 0.000000e+00 : f32
    %30 = vector.broadcast %cst_6 : f32 to vector<8x128xf32>
    %31 = arith.maximumf %29, %30 : vector<8x128xf32>
    %32 = vector.broadcast %22 : f32 to vector<8x128xf32>
    %33 = arith.mulf %31, %32 : vector<8x128xf32>
    %34 = arith.addf %18, %33 : vector<8x128xf32>
    %c2 = arith.constant 2 : index
    %35 = memref.load %arg1[%c2] : memref<17xf32, #tpu.memory_space<smem>>
    %c6 = arith.constant 6 : index
    %36 = memref.load %arg1[%c6] : memref<17xf32, #tpu.memory_space<smem>>
    %c10 = arith.constant 10 : index
    %37 = memref.load %arg1[%c10] : memref<17xf32, #tpu.memory_space<smem>>
    %c14 = arith.constant 14 : index
    %38 = memref.load %arg1[%c14] : memref<17xf32, #tpu.memory_space<smem>>
    %39 = vector.broadcast %35 : f32 to vector<8x128xf32>
    %40 = arith.mulf %1, %39 : vector<8x128xf32>
    %41 = vector.broadcast %36 : f32 to vector<8x128xf32>
    %42 = arith.mulf %3, %41 : vector<8x128xf32>
    %43 = arith.addf %40, %42 : vector<8x128xf32>
    %44 = vector.broadcast %37 : f32 to vector<8x128xf32>
    %45 = arith.addf %43, %44 : vector<8x128xf32>
    %cst_7 = arith.constant 0.000000e+00 : f32
    %46 = vector.broadcast %cst_7 : f32 to vector<8x128xf32>
    %47 = arith.maximumf %45, %46 : vector<8x128xf32>
    %48 = vector.broadcast %38 : f32 to vector<8x128xf32>
    %49 = arith.mulf %47, %48 : vector<8x128xf32>
    %50 = arith.addf %34, %49 : vector<8x128xf32>
    %c3 = arith.constant 3 : index
    %51 = memref.load %arg1[%c3] : memref<17xf32, #tpu.memory_space<smem>>
    %c7 = arith.constant 7 : index
    %52 = memref.load %arg1[%c7] : memref<17xf32, #tpu.memory_space<smem>>
    %c11 = arith.constant 11 : index
    %53 = memref.load %arg1[%c11] : memref<17xf32, #tpu.memory_space<smem>>
    %c15 = arith.constant 15 : index
    %54 = memref.load %arg1[%c15] : memref<17xf32, #tpu.memory_space<smem>>
    %55 = vector.broadcast %51 : f32 to vector<8x128xf32>
    %56 = arith.mulf %1, %55 : vector<8x128xf32>
    %57 = vector.broadcast %52 : f32 to vector<8x128xf32>
    %58 = arith.mulf %3, %57 : vector<8x128xf32>
    %59 = arith.addf %56, %58 : vector<8x128xf32>
    %60 = vector.broadcast %53 : f32 to vector<8x128xf32>
    %61 = arith.addf %59, %60 : vector<8x128xf32>
    %cst_8 = arith.constant 0.000000e+00 : f32
    %62 = vector.broadcast %cst_8 : f32 to vector<8x128xf32>
    %63 = arith.maximumf %61, %62 : vector<8x128xf32>
    %64 = vector.broadcast %54 : f32 to vector<8x128xf32>
    %65 = arith.mulf %63, %64 : vector<8x128xf32>
    %66 = arith.addf %50, %65 : vector<8x128xf32>
    %c16 = arith.constant 16 : index
    %67 = memref.load %arg1[%c16] : memref<17xf32, #tpu.memory_space<smem>>
    %68 = vector.broadcast %67 : f32 to vector<8x128xf32>
    %69 = arith.addf %66, %68 : vector<8x128xf32>
    %cst_9 = arith.constant 5.000000e-01 : f32
    %70 = vector.broadcast %cst_9 : f32 to vector<8x128xf32>
    %71 = arith.mulf %70, %69 : vector<8x128xf32>
    %72 = math.tanh %71 : vector<8x128xf32>
    %cst_10 = arith.constant 5.000000e-01 : f32
    %73 = vector.broadcast %cst_10 : f32 to vector<8x128xf32>
    %74 = arith.mulf %73, %72 : vector<8x128xf32>
    %cst_11 = arith.constant 5.000000e-01 : f32
    %75 = vector.broadcast %cst_11 : f32 to vector<8x128xf32>
    %76 = arith.addf %74, %75 : vector<8x128xf32>
    %c0_12 = arith.constant 0 : index
    %c0_13 = arith.constant 0 : index
    %77 = vector.load %arg3[%c0_12, %c0_13] : memref<8x128xf32, #tpu.memory_space<vmem>>, vector<8x128xf32>
    tpu.vector_store %arg3[%c0_12, %c0_13], %76 {strides = array<i32>} : memref<8x128xf32, #tpu.memory_space<vmem>>, vector<8x128xf32>,
    return
  }
  func.func @transform_0(%arg0: i32) -> i32 {
    %c0_i32 = arith.constant 0 : i32
    %c0_i32_0 = arith.constant 0 : i32
    return %c0_i32 : i32
  }
  func.func @transform_1(%arg0: i32) -> (i32, i32, i32) {
    %c0_i32 = arith.constant 0 : i32
    %c0_i32_0 = arith.constant 0 : i32
    %c0_i32_1 = arith.constant 0 : i32
    return %c0_i32, %arg0, %c0_i32_0 : i32, i32, i32
  }
  func.func @transform_2(%arg0: i32) -> (i32, i32) {
    %c0_i32 = arith.constant 0 : i32
    %c0_i32_0 = arith.constant 0 : i32
    return %arg0, %c0_i32 : i32, i32
  }
}

</mosaic_0001>

<llo_original>
// kernel: tpu_custom_call.1
$region0: #{tpu_custom_call.1}
  #allocation0 [shape = 'u32[]', space=smem, size = 0x4, offset = 0x4, fixed_abs, tag = 'smem constant byte address 0x4 - core index']
  #allocation1 [shape = 'u32[72,128]{1,0:T(1,128)}', space=vmem, size = 0x9000, scoped, tag = 'internal scratch']
  %s0 = inlined_call_operand.hbm [shape: f32[17], index: 0, kind: input, shape index: {}]
  %s1 = inlined_call_operand.hbm [shape: f32[2,8,128], index: 1, kind: input, shape index: {}]
  %s2 = inlined_call_operand.hbm [shape: f32[8,128], index: 2, kind: output, shape index: {}]
  %s3 = sld [smem:[#allocation0]]
  $region26: #{tpu_custom_call.1} parent=0
    _
  %s5 = ssub.s32 1, %s3
  %s6 = scalar_select 0, %s5, %s3
  $region1: #{tpu_custom_call.1} parent=0
    #allocation2 [shape = 'u8[512]{0}', space=smem, size = 0x200, scoped, tag = 'input window, operand 0, single buffered']
    #allocation3 [shape = 's32[1]{0}', space=sflag, size = 0x4, scoped, tag = 'scoped memory for tpu_custom_call.1']
    #allocation4 [shape = 's32[1]{0}', space=sflag, size = 0x4, scoped, tag = 'scoped memory for tpu_custom_call.1']
    #allocation5 [shape = 's32[1]{0}', space=sflag, size = 0x4, scoped, tag = 'scoped memory for tpu_custom_call.1']
    #allocation6 [shape = 'u8[8192]{0}', space=vmem, size = 0x2000, scoped, tag = 'input window, operand 1, single buffered']
    #allocation7 [shape = 'u8[4096]{0}', space=vmem, size = 0x1000, scoped, tag = 'output window, operand 0, single buffered']
    %7 = vsyncpa [#allocation5], 0
    %8 = vsyncpa [#allocation3], 0
    %9 = vsyncpa [#allocation4], 0
    // Predicated region
    $region2: #{tpu_custom_call.1} parent=1 // pred_check
      _
    $region3: #{tpu_custom_call.1} parent=1 // pred_check_branch
      %11 = sbr.rel (0) target = $region5
    $region4: #{tpu_custom_call.1} parent=1 // pred_region
      %13 = vsyncadd [#allocation5], 0
      %s15 = sshll.u32 %s0, 4
      %s16 = int_to_ptr.hbm [resolvable:$true] %s15
      %18 = dma.hbm_to_smem %s16, 16, [#allocation2], [#allocation5]
    $region5: #{tpu_custom_call.1} parent=1 // pred_fallthru
      _
    // Predicated region
    $region6: #{tpu_custom_call.1} parent=1 // pred_check
      _
    $region7: #{tpu_custom_call.1} parent=1 // pred_check_branch
      %20 = sbr.rel (0) target = $region9
    $region8: #{tpu_custom_call.1} parent=1 // pred_region
      %22 = vsyncadd [#allocation3], 0
      %s23 = sshll.u32 %s1, 4
      %s24 = int_to_ptr.hbm [resolvable:$true] %s23
      %s25 = sshll.u32 [#allocation6], 4
      %s26 = int_to_ptr.vmem [resolvable:$true] %s25
      %31 = dma.hbm_to_vmem [thread:$0]  %s24, 256, %s26, [#allocation3], 128, 128, 8
    $region9: #{tpu_custom_call.1} parent=1 // pred_fallthru
      _
    // Predicated region
    $region10: #{tpu_custom_call.1} parent=1 // pred_check
      _
    $region11: #{tpu_custom_call.1} parent=1 // pred_check_branch
      %33 = sbr.rel (0) target = $region13
    $region12: #{tpu_custom_call.1} parent=1 // pred_region
      %35 = dma.done [#allocation5], 16
    $region13: #{tpu_custom_call.1} parent=1 // pred_fallthru
      _
    // Predicated region
    $region14: #{tpu_custom_call.1} parent=1 // pred_check
      _
    $region15: #{tpu_custom_call.1} parent=1 // pred_check_branch
      %37 = sbr.rel (0) target = $region17
    $region16: #{tpu_custom_call.1} parent=1 // pred_region
      %39 = dma.done [#allocation3], 256
    $region17: #{tpu_custom_call.1} parent=1 // pred_fallthru
      _
    %40 = sfence
    %v41 = vld [vmem:[#allocation6] sm:$0xff]
    %s42 = scalar_lea.vmem [#allocation6], 8
    %v43 = vld [vmem:[%s42] sm:$0xff]
    %s44 = sld [smem:[#allocation2]]
    %s45 = sld [smem:[#allocation2 + $0x4]]
    %s46 = sld [smem:[#allocation2 + $0x8]]
    %s47 = sld [smem:[#allocation2 + $0xc]]
    %v48 = vstv %s44
    %v49 = vmul.f32 %v41, %v48
    %v50 = vstv %s45
    %v51 = vmul.f32 %v43, %v50
    %v52 = vadd.f32 %v49, %v51
    %v53 = vstv %s46
    %v54 = vadd.f32 %v52, %v53
    %v55 = vmax.f32 %v54, 0.0
    %v56 = vstv %s47
    %v57 = vmul.f32 %v55, %v56
    %s58 = sld [smem:[#allocation2 + $0x1]]
    %s59 = sld [smem:[#allocation2 + $0x5]]
    %s60 = sld [smem:[#allocation2 + $0x9]]
    %s61 = sld [smem:[#allocation2 + $0xd]]
    %v62 = vstv %s58
    %v63 = vmul.f32 %v41, %v62
    %v64 = vstv %s59
    %v65 = vmul.f32 %v43, %v64
    %v66 = vadd.f32 %v63, %v65
    %v67 = vstv %s60
    %v68 = vadd.f32 %v66, %v67
    %v69 = vmax.f32 %v68, 0.0
    %v70 = vstv %s61
    %v71 = vmul.f32 %v69, %v70
    %v72 = vadd.f32 %v57, %v71
    %s73 = sld [smem:[#allocation2 + $0x2]]
    %s74 = sld [smem:[#allocation2 + $0x6]]
    %s75 = sld [smem:[#allocation2 + $0xa]]
    %s76 = sld [smem:[#allocation2 + $0xe]]
    %v77 = vstv %s73
    %v78 = vmul.f32 %v41, %v77
    %v79 = vstv %s74
    %v80 = vmul.f32 %v43, %v79
    %v81 = vadd.f32 %v78, %v80
    %v82 = vstv %s75
    %v83 = vadd.f32 %v81, %v82
    %v84 = vmax.f32 %v83, 0.0
    %v85 = vstv %s76
    %v86 = vmul.f32 %v84, %v85
    %v87 = vadd.f32 %v72, %v86
    %s88 = sld [smem:[#allocation2 + $0x3]]
    %s89 = sld [smem:[#allocation2 + $0x7]]
    %s90 = sld [smem:[#allocation2 + $0xb]]
    %s91 = sld [smem:[#allocation2 + $0xf]]
    %v92 = vstv %s88
    %v93 = vmul.f32 %v41, %v92
    %v94 = vstv %s89
    %v95 = vmul.f32 %v43, %v94
    %v96 = vadd.f32 %v93, %v95
    %v97 = vstv %s90
    %v98 = vadd.f32 %v96, %v97
    %v99 = vmax.f32 %v98, 0.0
    %v100 = vstv %s91
    %v101 = vmul.f32 %v99, %v100
    %v102 = vadd.f32 %v87, %v101
    %s103 = sld [smem:[#allocation2 + $0x10]]
    %v104 = vstv %s103
    %v105 = vadd.f32 %v102, %v104
    %v106 = vmul.f32 %v105, 0.5
    %v107 = vtanh.pop %v106
    %v108 = vmul.f32 %v107, 0.5
    %v109 = vadd.f32 %v108, 0.5
    %110 = vst [vmem:[#allocation7] sm:$0xff] %v109
    // Predicated region
    $region18: #{tpu_custom_call.1} parent=1 // pred_check
      _
    $region19: #{tpu_custom_call.1} parent=1 // pred_check_branch
      %112 = sbr.rel (0) target = $region21
    $region20: #{tpu_custom_call.1} parent=1 // pred_region
      %114 = vsyncadd [#allocation4], 0
      %s116 = sshll.u32 [#allocation7], 4
      %s117 = int_to_ptr.vmem [resolvable:$true] %s116
      %s118 = sshll.u32 %s2, 4
      %s119 = int_to_ptr.hbm [resolvable:$true] %s118
      %121 = dma.vmem_to_hbm [thread:$0]  %s117, 128, %s119, [#allocation4]
    $region21: #{tpu_custom_call.1} parent=1 // pred_fallthru
      _
    // Predicated region
    $region22: #{tpu_custom_call.1} parent=1 // pred_check
      _
    $region23: #{tpu_custom_call.1} parent=1 // pred_check_branch
      %123 = sbr.rel (0) target = $region25
    $region24: #{tpu_custom_call.1} parent=1 // pred_region
      %125 = dma.done [#allocation4], 128
    $region25: #{tpu_custom_call.1} parent=1 // pred_fallthru
      _
    %126 = vsyncpa [#allocation3], 1
    %127 = vsyncpa [#allocation4], 1
    %128 = vsyncpa [#allocation5], 1

</llo_original>
